<compile_context>
chip_gen: v7x
topology: tpu7x:2x2x1
jax: 0.10.0
libtpu: 0.0.40
codegen_flags: <defaults>
</compile_context>

<pallas_src>
import functools

import jax
import jax.numpy as jnp
from jax import lax
from jax.experimental import pallas as pl
from jax.experimental.pallas import tpu as pltpu


def se_block_kernel(x_ref, w1t_ref, b1_ref, w2_ref, b2_ref, o_ref, s_ref, *,
                    batches_per_block, channels):
    # x_ref : (rows, HW_pad), rows = batches_per_block * C, rows ordered
    #         (batch, channel); trailing padded lanes (if any) are zeros.
    # w1t_ref: (C, Cr) == w1.T / HW     b1_ref: (1, Cr)
    # w2_ref : (C, Cr)                  b2_ref: (C, 1)
    # s_ref  : (rows, 1) f32 VMEM scratch (pooled sums, then sigmoid gates)
    x = x_ref[...]

    # squeeze: one full-slab lane reduce (raw sum; 1/HW is folded into w1t)
    s_ref[...] = jnp.sum(x.astype(jnp.float32), axis=1, keepdims=True)

    w1t = w1t_ref[...]
    b1 = b1_ref[...]
    w2 = w2_ref[...]
    b2 = b2_ref[...]

    # excitation: tiny per-batch FC chain on (C,*) vregs; overwrites the
    # pooled rows of s_ref with the per-channel sigmoid gates.
    def fc_body(b, carry):
        r0 = pl.multiple_of(b * channels, channels)
        pooled = s_ref[pl.ds(r0, channels), :]                     # (C, 1)
        h = jnp.sum(w1t * pooled, axis=0, keepdims=True) + b1      # (1, Cr)
        h = jnp.maximum(h, 0.0)
        g = jnp.sum(w2 * h, axis=1, keepdims=True) + b2            # (C, 1)
        s_ref[pl.ds(r0, channels), :] = jax.nn.sigmoid(g)
        return carry

    lax.fori_loop(0, batches_per_block, fc_body, 0,
                  unroll=min(batches_per_block, 8))

    # scale: one broadcast multiply + one unmasked full-slab store
    o_ref[...] = (x * s_ref[...].astype(x.dtype)).astype(o_ref.dtype)


def _vmem_capacity_bytes():
    try:
        return int(pltpu.get_tpu_info().vmem_capacity_bytes)
    except Exception:
        return 64 << 20   # conservative fallback (v7x per-TensorCore VMEM)


def _batches_per_block(B, C, HW_pad, itemsize, vmem_cap):
    """Pick the per-grid-step batch group.

    Constraints / preferences:
      * rows = bb*C sublane-dense (multiple of 8) unless the block covers the
        whole array, and B % bb == 0.
      * block fits a generation-aware VMEM budget (in+out double-buffered).
      * once blocks reach ~1 MiB (~85% of HBM roofline), prefer keeping >=4
        grid steps for software pipelining and v7x megacore sharding.
    """
    block_budget = min(vmem_cap // 8, 16 << 20)
    legal = [bb for bb in range(1, B + 1)
             if B % bb == 0 and ((bb * C) % 8 == 0 or bb == B)]
    bytes_of = lambda bb: bb * C * HW_pad * itemsize
    fitting = [bb for bb in legal if bytes_of(bb) <= block_budget]
    if not fitting:
        # Best effort: smallest legal block; vmem_limit_bytes is raised to the
        # actual footprint below, so this fails loudly only if truly too big.
        return min(legal)
    min_block = 1 << 20
    preferred = [bb for bb in fitting
                 if B // bb >= 4 and bytes_of(bb) >= min_block]
    if preferred:
        return min(preferred)          # most grid steps at >=1 MiB blocks
    multi = [bb for bb in fitting if B // bb >= 2]
    if multi:
        return max(multi)              # keep >=2 grid steps if possible
    return max(fitting)


def se_block(x, w1, b1, w2, b2):
    """x: (B, C, H, W). Returns x * sigmoid(fc2(relu(fc1(avgpool(x)))))."""
    B, C, H, W = x.shape
    Cr = w1.shape[0]
    HW = H * W
    HW_pad = max(128, ((HW + 127) // 128) * 128)   # lane-dense columns
    itemsize = x.dtype.itemsize

    vmem_cap = _vmem_capacity_bytes()
    bb = _batches_per_block(B, C, HW_pad, itemsize, vmem_cap)
    rows = bb * C

    x2 = x.reshape(B * C, HW)
    if HW_pad != HW:
        x2 = jnp.pad(x2, ((0, 0), (0, HW_pad - HW)))

    # 1/HW folded into the first FC weight (kernel uses a raw row-sum).
    w1t = jnp.transpose(w1).astype(jnp.float32) / HW   # (C, Cr)
    b1r = b1.reshape(1, Cr).astype(jnp.float32)
    w2m = w2.astype(jnp.float32)                       # (C, Cr)
    b2c = b2.reshape(C, 1).astype(jnp.float32)

    # Generation-aware scoped-VMEM limit: actual double-buffered footprint
    # plus headroom, capped at 3/4 of physical VMEM.
    block_bytes = rows * HW_pad * itemsize
    weight_bytes = (2 * C * Cr + Cr + C + rows) * 4
    needed = 4 * block_bytes + weight_bytes + (1 << 20)
    vmem_limit = int(min(vmem_cap * 3 // 4, max(needed, 32 << 20)))

    kernel = functools.partial(se_block_kernel,
                               batches_per_block=bb, channels=C)

    out = pl.pallas_call(
        kernel,
        out_shape=jax.ShapeDtypeStruct((B * C, HW_pad), x.dtype),
        grid_spec=pltpu.PrefetchScalarGridSpec(
            num_scalar_prefetch=0,
            grid=(B // bb,),
            in_specs=[
                pl.BlockSpec((rows, HW_pad), lambda i: (i, 0)),   # x row slab
                pl.BlockSpec((C, Cr), lambda i: (0, 0)),   # w1.T/HW (resident)
                pl.BlockSpec((1, Cr), lambda i: (0, 0)),   # b1
                pl.BlockSpec((C, Cr), lambda i: (0, 0)),   # w2
                pl.BlockSpec((C, 1), lambda i: (0, 0)),    # b2
            ],
            out_specs=pl.BlockSpec((rows, HW_pad), lambda i: (i, 0)),
            scratch_shapes=[pltpu.VMEM((rows, 1), jnp.float32)],
        ),
        compiler_params=pltpu.CompilerParams(
            dimension_semantics=("parallel",),
            vmem_limit_bytes=vmem_limit),
    )(x2, w1t, b1r, w2m, b2c)

    if HW_pad != HW:
        out = out[:, :HW]
    return out.reshape(B, C, H, W)


def se_block_reference(x, w1, b1, w2, b2):
    # pure-JAX reference of the PyTorch forward
    pooled = jnp.mean(x, axis=(2, 3))                           # (B, C)
    h = jnp.maximum(pooled @ w1.T + b1, 0.0)                    # (B, Cr)
    s = jax.nn.sigmoid(h @ w2.T + b2)                           # (B, C)
    return x * s[:, :, None, None]


if __name__ == "__main__":
    # module config: channels=4, reduction=2  -> fc: 4 -> 2 -> 4
    B, C, H, W = 2, 4, 16, 16
    reduction = 2
    Cr = C // reduction

    key = jax.random.PRNGKey(0)
    kx, k1, k2, k3, k4 = jax.random.split(key, 5)

    x = jax.random.normal(kx, (B, C, H, W), dtype=jnp.float32)
    # 1x1 conv weights squeezed to matrices
    w1 = 0.3 * jax.random.normal(k1, (Cr, C), dtype=jnp.float32)
    b1 = 0.1 * jax.random.normal(k2, (Cr,), dtype=jnp.float32)
    w2 = 0.3 * jax.random.normal(k3, (C, Cr), dtype=jnp.float32)
    b2 = 0.1 * jax.random.normal(k4, (C,), dtype=jnp.float32)

    out = se_block(x, w1, b1, w2, b2)
    jax.block_until_ready(out)

    ref = se_block_reference(x, w1, b1, w2, b2)
    assert out.shape == (B, C, H, W)
    assert jnp.allclose(out, ref, atol=1e-5, rtol=1e-5), "mismatch vs reference"

    print("KERNEL_OK")
</pallas_src>

<mosaic_0001>
module attributes {stable_mosaic.version = 11 : i64} {
  func.func @se_block_kernel(%arg0: i32, %arg1: memref<8x256xf32, #tpu.memory_space<vmem>>, %arg2: memref<4x2xf32, #tpu.memory_space<vmem>>, %arg3: memref<1x2xf32, #tpu.memory_space<vmem>>, %arg4: memref<4x2xf32, #tpu.memory_space<vmem>>, %arg5: memref<4x1xf32, #tpu.memory_space<vmem>>, %arg6: memref<8x256xf32, #tpu.memory_space<vmem>>, %arg7: memref<8x1xf32, #tpu.memory_space<vmem>>) attributes {dimension_semantics = [#tpu.dimension_semantics<parallel>], iteration_bounds = array<i64: 1>, scalar_prefetch = 0 : i64, scratch_operands = 1 : i64, tpu.core_type = #tpu.core_type<tc>, window_params = [{transform_indices = @transform_0, window_bounds = array<i64: 8, 256>}, {pipeline_mode = #tpu.pipeline_mode<synchronous>, transform_indices = @transform_1, window_bounds = array<i64: 4, 2>}, {pipeline_mode = #tpu.pipeline_mode<synchronous>, transform_indices = @transform_2, window_bounds = array<i64: 1, 2>}, {pipeline_mode = #tpu.pipeline_mode<synchronous>, transform_indices = @transform_3, window_bounds = array<i64: 4, 2>}, {pipeline_mode = #tpu.pipeline_mode<synchronous>, transform_indices = @transform_4, window_bounds = array<i64: 4, 1>}, {transform_indices = @transform_5, window_bounds = array<i64: 8, 256>}]} {
    %c0 = arith.constant 0 : index
    %c0_0 = arith.constant 0 : index
    %0 = vector.load %arg1[%c0, %c0_0] : memref<8x256xf32, #tpu.memory_space<vmem>>, vector<8x256xf32>
    %cst = arith.constant dense<0.000000e+00> : vector<8xf32>
    %1 = vector.multi_reduction <add>, %0, %cst [1] : vector<8x256xf32> to vector<8xf32>
    %2 = vector.shape_cast %1 : vector<8xf32> to vector<8x1xf32>
    %c0_1 = arith.constant 0 : index
    %c0_2 = arith.constant 0 : index
    %3 = vector.load %arg7[%c0_1, %c0_2] : memref<8x1xf32, #tpu.memory_space<vmem>>, vector<8x1xf32>
    tpu.vector_store %arg7[%c0_1, %c0_2], %2 {strides = array<i32>} : memref<8x1xf32, #tpu.memory_space<vmem>>, vector<8x1xf32>,
    %c0_3 = arith.constant 0 : index
    %c0_4 = arith.constant 0 : index
    %4 = vector.load %arg2[%c0_3, %c0_4] : memref<4x2xf32, #tpu.memory_space<vmem>>, vector<4x2xf32>
    %c0_5 = arith.constant 0 : index
    %c0_6 = arith.constant 0 : index
    %5 = vector.load %arg3[%c0_5, %c0_6] : memref<1x2xf32, #tpu.memory_space<vmem>>, vector<1x2xf32>
    %c0_7 = arith.constant 0 : index
    %c0_8 = arith.constant 0 : index
    %6 = vector.load %arg4[%c0_7, %c0_8] : memref<4x2xf32, #tpu.memory_space<vmem>>, vector<4x2xf32>
    %c0_9 = arith.constant 0 : index
    %c0_10 = arith.constant 0 : index
    %7 = vector.load %arg5[%c0_9, %c0_10] : memref<4x1xf32, #tpu.memory_space<vmem>>, vector<4x1xf32>
    %c0_i32 = arith.constant 0 : i32
    %c4_i32 = arith.constant 4 : i32
    %8 = arith.muli %c0_i32, %c4_i32 : i32
    %9 = tpu.assume_multiple %8, 4 : i32
    %10 = arith.index_cast %9 : i32 to index
    %c0_11 = arith.constant 0 : index
    %11 = vector.load %arg7[%10, %c0_11] : memref<8x1xf32, #tpu.memory_space<vmem>>, vector<4x1xf32>
    %12 = vector.broadcast %11 : vector<4x1xf32> to vector<4x2xf32>
    %13 = arith.mulf %4, %12 : vector<4x2xf32>
    %cst_12 = arith.constant dense<0.000000e+00> : vector<2xf32>
    %14 = vector.multi_reduction <add>, %13, %cst_12 [0] : vector<4x2xf32> to vector<2xf32>
    %15 = vector.shape_cast %14 : vector<2xf32> to vector<1x2xf32>
    %16 = arith.addf %15, %5 : vector<1x2xf32>
    %cst_13 = arith.constant 0.000000e+00 : f32
    %17 = vector.broadcast %cst_13 : f32 to vector<1x2xf32>
    %18 = arith.maximumf %16, %17 : vector<1x2xf32>
    %19 = vector.broadcast %18 : vector<1x2xf32> to vector<4x2xf32>
    %20 = arith.mulf %6, %19 : vector<4x2xf32>
    %cst_14 = arith.constant dense<0.000000e+00> : vector<4xf32>
    %21 = vector.multi_reduction <add>, %20, %cst_14 [1] : vector<4x2xf32> to vector<4xf32>
    %22 = vector.shape_cast %21 : vector<4xf32> to vector<4x1xf32>
    %23 = arith.addf %22, %7 : vector<4x1xf32>
    %24 = arith.negf %23 : vector<4x1xf32>
    %25 = math.exp %24 : vector<4x1xf32>
    %cst_15 = arith.constant 1.000000e+00 : f32
    %26 = vector.broadcast %cst_15 : f32 to vector<4x1xf32>
    %27 = arith.addf %26, %25 : vector<4x1xf32>
    %28 = arith.divf %26, %27 : vector<4x1xf32>
    %29 = arith.index_cast %9 : i32 to index
    %c0_16 = arith.constant 0 : index
    %30 = vector.load %arg7[%29, %c0_16] : memref<8x1xf32, #tpu.memory_space<vmem>>, vector<4x1xf32>
    tpu.vector_store %arg7[%29, %c0_16], %28 {strides = array<i32>} : memref<8x1xf32, #tpu.memory_space<vmem>>, vector<4x1xf32>,
    %c1_i32 = arith.constant 1 : i32
    %c4_i32_17 = arith.constant 4 : i32
    %31 = arith.muli %c1_i32, %c4_i32_17 : i32
    %32 = tpu.assume_multiple %31, 4 : i32
    %33 = arith.index_cast %32 : i32 to index
    %c0_18 = arith.constant 0 : index
    %34 = vector.load %arg7[%33, %c0_18] : memref<8x1xf32, #tpu.memory_space<vmem>>, vector<4x1xf32>
    %35 = vector.broadcast %34 : vector<4x1xf32> to vector<4x2xf32>
    %36 = arith.mulf %4, %35 : vector<4x2xf32>
    %cst_19 = arith.constant dense<0.000000e+00> : vector<2xf32>
    %37 = vector.multi_reduction <add>, %36, %cst_19 [0] : vector<4x2xf32> to vector<2xf32>
    %38 = vector.shape_cast %37 : vector<2xf32> to vector<1x2xf32>
    %39 = arith.addf %38, %5 : vector<1x2xf32>
    %cst_20 = arith.constant 0.000000e+00 : f32
    %40 = vector.broadcast %cst_20 : f32 to vector<1x2xf32>
    %41 = arith.maximumf %39, %40 : vector<1x2xf32>
    %42 = vector.broadcast %41 : vector<1x2xf32> to vector<4x2xf32>
    %43 = arith.mulf %6, %42 : vector<4x2xf32>
    %cst_21 = arith.constant dense<0.000000e+00> : vector<4xf32>
    %44 = vector.multi_reduction <add>, %43, %cst_21 [1] : vector<4x2xf32> to vector<4xf32>
    %45 = vector.shape_cast %44 : vector<4xf32> to vector<4x1xf32>
    %46 = arith.addf %45, %7 : vector<4x1xf32>
    %47 = arith.negf %46 : vector<4x1xf32>
    %48 = math.exp %47 : vector<4x1xf32>
    %cst_22 = arith.constant 1.000000e+00 : f32
    %49 = vector.broadcast %cst_22 : f32 to vector<4x1xf32>
    %50 = arith.addf %49, %48 : vector<4x1xf32>
    %51 = arith.divf %49, %50 : vector<4x1xf32>
    %52 = arith.index_cast %32 : i32 to index
    %c0_23 = arith.constant 0 : index
    %53 = vector.load %arg7[%52, %c0_23] : memref<8x1xf32, #tpu.memory_space<vmem>>, vector<4x1xf32>
    tpu.vector_store %arg7[%52, %c0_23], %51 {strides = array<i32>} : memref<8x1xf32, #tpu.memory_space<vmem>>, vector<4x1xf32>,
    %c2_i32 = arith.constant 2 : i32
    %c0_24 = arith.constant 0 : index
    %c0_25 = arith.constant 0 : index
    %54 = vector.load %arg7[%c0_24, %c0_25] : memref<8x1xf32, #tpu.memory_space<vmem>>, vector<8x1xf32>
    %55 = vector.broadcast %54 : vector<8x1xf32> to vector<8x256xf32>
    %56 = arith.mulf %0, %55 : vector<8x256xf32>
    %c0_26 = arith.constant 0 : index
    %c0_27 = arith.constant 0 : index
    %57 = vector.load %arg6[%c0_26, %c0_27] : memref<8x256xf32, #tpu.memory_space<vmem>>, vector<8x256xf32>
    tpu.vector_store %arg6[%c0_26, %c0_27], %56 {strides = array<i32>} : memref<8x256xf32, #tpu.memory_space<vmem>>, vector<8x256xf32>,
    return
  }
  func.func @transform_0(%arg0: i32) -> (i32, i32) {
    %c0_i32 = arith.constant 0 : i32
    %c0_i32_0 = arith.constant 0 : i32
    return %arg0, %c0_i32 : i32, i32
  }
  func.func @transform_1(%arg0: i32) -> (i32, i32) {
    %c0_i32 = arith.constant 0 : i32
    %c0_i32_0 = arith.constant 0 : i32
    %c0_i32_1 = arith.constant 0 : i32
    return %c0_i32, %c0_i32_0 : i32, i32
  }
  func.func @transform_2(%arg0: i32) -> (i32, i32) {
    %c0_i32 = arith.constant 0 : i32
    %c0_i32_0 = arith.constant 0 : i32
    %c0_i32_1 = arith.constant 0 : i32
    return %c0_i32, %c0_i32_0 : i32, i32
  }
  func.func @transform_3(%arg0: i32) -> (i32, i32) {
    %c0_i32 = arith.constant 0 : i32
    %c0_i32_0 = arith.constant 0 : i32
    %c0_i32_1 = arith.constant 0 : i32
    return %c0_i32, %c0_i32_0 : i32, i32
  }
  func.func @transform_4(%arg0: i32) -> (i32, i32) {
    %c0_i32 = arith.constant 0 : i32
    %c0_i32_0 = arith.constant 0 : i32
    %c0_i32_1 = arith.constant 0 : i32
    return %c0_i32, %c0_i32_0 : i32, i32
  }
  func.func @transform_5(%arg0: i32) -> (i32, i32) {
    %c0_i32 = arith.constant 0 : i32
    %c0_i32_0 = arith.constant 0 : i32
    return %arg0, %c0_i32 : i32, i32
  }
}

</mosaic_0001>

<llo_original>
// kernel: tpu_custom_call.1
$region0: #{tpu_custom_call.1}
  #allocation0 [shape = 'u32[]', space=smem, size = 0x4, offset = 0x4, fixed_abs, tag = 'smem constant byte address 0x4 - core index']
  #allocation1 [shape = 'u32[144,128]{1,0:T(1,128)}', space=vmem, size = 0x12000, scoped, tag = 'internal scratch']
  #allocation2 [shape = 'f32[8,1]{1,0:T(8,128)}', space=vmem, size = 0x1000, scoped, tag = 'scratch operand']
  %s0 = inlined_call_operand.vmem [shape: f32[8,256], index: 0, kind: input, shape index: {}]
  %s1 = inlined_call_operand.vmem [shape: f32[4,2], index: 1, kind: input, shape index: {}]
  %s2 = inlined_call_operand.vmem [shape: f32[1,2], index: 2, kind: input, shape index: {}]
  %s3 = inlined_call_operand.vmem [shape: f32[4,2], index: 3, kind: input, shape index: {}]
  %s4 = inlined_call_operand.vmem [shape: f32[4,1], index: 4, kind: input, shape index: {}]
  %s5 = inlined_call_operand.hbm [shape: f32[8,256], index: 5, kind: output, shape index: {}]
  %s6 = sld [smem:[#allocation0]]
  $region30: #{tpu_custom_call.1} parent=0
    _
  %s8 = ssub.s32 1, %s6
  %s9 = scalar_select 0, %s8, %s6
  $region1: #{tpu_custom_call.1} parent=0
    #allocation3 [shape = 'u8[8192]{0}', space=vmem, size = 0x2000, scoped, tag = 'output window, operand 0, single buffered']
    #allocation4 [shape = 's32[1]{0}', space=sflag, size = 0x4, scoped, tag = 'scoped memory for tpu_custom_call.1']
    %10 = vsyncpa [#allocation4], 0
    // Predicated region
    $region2: #{tpu_custom_call.1} parent=1 // pred_check
      _
    $region3: #{tpu_custom_call.1} parent=1 // pred_check_branch
      %12 = sbr.rel (0) target = $region5
    $region4: #{tpu_custom_call.1} parent=1 // pred_region
      _
    $region5: #{tpu_custom_call.1} parent=1 // pred_fallthru
      _
    // Predicated region
    $region6: #{tpu_custom_call.1} parent=1 // pred_check
      _
    $region7: #{tpu_custom_call.1} parent=1 // pred_check_branch
      %14 = sbr.rel (0) target = $region9
    $region8: #{tpu_custom_call.1} parent=1 // pred_region
      _
    $region9: #{tpu_custom_call.1} parent=1 // pred_fallthru
      _
    // Predicated region
    $region10: #{tpu_custom_call.1} parent=1 // pred_check
      _
    $region11: #{tpu_custom_call.1} parent=1 // pred_check_branch
      %16 = sbr.rel (0) target = $region13
    $region12: #{tpu_custom_call.1} parent=1 // pred_region
      _
    $region13: #{tpu_custom_call.1} parent=1 // pred_fallthru
      _
    // Predicated region
    $region14: #{tpu_custom_call.1} parent=1 // pred_check
      _
    $region15: #{tpu_custom_call.1} parent=1 // pred_check_branch
      %18 = sbr.rel (0) target = $region17
    $region16: #{tpu_custom_call.1} parent=1 // pred_region
      _
    $region17: #{tpu_custom_call.1} parent=1 // pred_fallthru
      _
    // Predicated region
    $region18: #{tpu_custom_call.1} parent=1 // pred_check
      _
    $region19: #{tpu_custom_call.1} parent=1 // pred_check_branch
      %20 = sbr.rel (0) target = $region21
    $region20: #{tpu_custom_call.1} parent=1 // pred_region
      _
    $region21: #{tpu_custom_call.1} parent=1 // pred_fallthru
      _
    %v21 = vld [vmem:[%s0] sm:$0xff]
    %v22 = vld [vmem:[%s0 + $0x8] sm:$0xff]
    %v23 = vadd.f32 %v21, %v22
    %24 = vadd.xlane.f32.xlu0 %v23
    %v25 = vpop.xlane.xlu0 %24
    %vm26 = vcmask 7168
    %27 = vst.msk [vmem:[#allocation2] sm:$0xff] %vm26, %v25
    %v28 = vld [vmem:[%s1] sm:$0xf]
    %v29 = vld [vmem:[%s2] sm:$0x1]
    %v30 = vld [vmem:[%s3] sm:$0xf]
    %v31 = vld [vmem:[%s4] sm:$0xf]
    %v32 = vld [vmem:[#allocation2] sm:$0xf]
    %34 = vset.pattern.permute.xlu0 0
    %35 = vperm.xlu0 %34, %v32
    %v36 = vpop.permute.xlu0 %35
    %v38 = vmul.f32 %v28, %v36
    %vm39 = vcmask 11264
    %v40 = vsel %vm39, %v38, 0.0
    %v41 = vrot.slane %v40, 4
    %v42 = vadd.f32 %v40, %v41
    %v43 = vrot.slane %v42, 2
    %v44 = vadd.f32 %v42, %v43
    %v45 = vrot.slane %v44, 1
    %v46 = vadd.f32 %v44, %v45
    %v47 = vadd.f32 %v46, %v29
    %v48 = vmax.f32 %v47, 0.0
    %v49 = vlaneseq
    %v50 = vshrl.u32 %v49, 7
    %v51 = vsub.s32 0, %v50
    %v52 = vrot.slane %v48, %v51
    %v53 = vmul.f32 %v30, %v52
    %v54 = vsel %vm39, %v53, 0.0
    %55 = vadd.xlane.f32.xlu0 %v54
    %v56 = vpop.xlane.xlu0 %55
    %v57 = vadd.f32 %v56, %v31
    %v58 = vxor.u32 %v57, 2147483648
    %v59 = vmul.f32 %v58, 1.442695
    %v60 = vpow.pop %v59
    %v61 = vadd.f32 %v60, 1.0
    %v62 = vrcp.pop %v61
    %v63 = vmul.f32 1.0, %v62
    %vm64 = vcmask 3072
    %65 = vst.msk [vmem:[#allocation2] sm:$0xf] %vm64, %v63
    %s66 = scalar_lea.vmem [#allocation2], 4
    %v67 = vld [vmem:[%s66] sm:$0xf]
    %69 = vset.pattern.permute.xlu0 0
    %70 = vperm.xlu0 %69, %v67
    %v71 = vpop.permute.xlu0 %70
    %v73 = vmul.f32 %v28, %v71
    %v74 = vsel %vm39, %v73, 0.0
    %v75 = vrot.slane %v74, 4
    %v76 = vadd.f32 %v74, %v75
    %v77 = vrot.slane %v76, 2
    %v78 = vadd.f32 %v76, %v77
    %v79 = vrot.slane %v78, 1
    %v80 = vadd.f32 %v78, %v79
    %v81 = vadd.f32 %v80, %v29
    %v82 = vmax.f32 %v81, 0.0
    %v83 = vlaneseq
    %v84 = vshrl.u32 %v83, 7
    %v85 = vsub.s32 0, %v84
    %v86 = vrot.slane %v82, %v85
    %v87 = vmul.f32 %v30, %v86
    %v88 = vsel %vm39, %v87, 0.0
    %89 = vadd.xlane.f32.xlu0 %v88
    %v90 = vpop.xlane.xlu0 %89
    %v91 = vadd.f32 %v90, %v31
    %v92 = vxor.u32 %v91, 2147483648
    %v93 = vmul.f32 %v92, 1.442695
    %v94 = vpow.pop %v93
    %v95 = vadd.f32 %v94, 1.0
    %v96 = vrcp.pop %v95
    %v97 = vmul.f32 1.0, %v96
    %98 = vst.msk [vmem:[%s66] sm:$0xf] %vm64, %v97
    %v99 = vld [vmem:[#allocation2] sm:$0xff]
    %101 = vset.pattern.permute.xlu0 0
    %102 = vperm.xlu0 %101, %v99
    %v103 = vpop.permute.xlu0 %102
    %v105 = vmul.f32 %v21, %v103
    %v106 = vmul.f32 %v22, %v103
    %107 = vst [vmem:[#allocation3] sm:$0xff] %v105
    %108 = vst [vmem:[#allocation3 + $0x8] sm:$0xff] %v106
    // Predicated region
    $region22: #{tpu_custom_call.1} parent=1 // pred_check
      _
    $region23: #{tpu_custom_call.1} parent=1 // pred_check_branch
      %110 = sbr.rel (0) target = $region25
    $region24: #{tpu_custom_call.1} parent=1 // pred_region
      %s112 = ssub.s32 256, 256
      %113 = vsyncadd [#allocation4], %s112
      %s115 = sshll.u32 [#allocation3], 4
      %s116 = int_to_ptr.vmem [resolvable:$true] %s115
      %118 = dma.vmem_to_hbm [thread:$0]  %s116, 256, %s5, [#allocation4]
    $region25: #{tpu_custom_call.1} parent=1 // pred_fallthru
      _
    // Predicated region
    $region26: #{tpu_custom_call.1} parent=1 // pred_check
      _
    $region27: #{tpu_custom_call.1} parent=1 // pred_check_branch
      %120 = sbr.rel (0) target = $region29
    $region28: #{tpu_custom_call.1} parent=1 // pred_region
      %121 = dma.done [#allocation4], 256
    $region29: #{tpu_custom_call.1} parent=1 // pred_fallthru
      _
    %122 = vsyncpa [#allocation4], 1

</llo_original>
